<compile_context>
chip_gen: v7x
topology: tpu7x:2x2x1
jax: 0.10.0
libtpu: 0.0.40
codegen_flags: <defaults>
</compile_context>

<pallas_src>
import functools

import jax
import jax.numpy as jnp
from jax.experimental import pallas as pl
from jax.experimental.pallas import tpu as pltpu

_LANE = 128


def _round_up(x, m):
    return (x + m - 1) // m * m


def _decoder_mlp_kernel(inp_ref, w1_ref, w2_ref, w3_ref, w4_ref, b_ref,
                        out_ref, *, h_p, y_p):
    """Fused 4-layer MLP: (Linear -> ReLU) x 3 then Linear, on one row tile."""
    h = jnp.dot(inp_ref[...], w1_ref[...], preferred_element_type=jnp.float32)
    h = jnp.maximum(h + b_ref[0:1, :h_p], 0.0)
    h = jnp.dot(h, w2_ref[...], preferred_element_type=jnp.float32)
    h = jnp.maximum(h + b_ref[1:2, :h_p], 0.0)
    h = jnp.dot(h, w3_ref[...], preferred_element_type=jnp.float32)
    h = jnp.maximum(h + b_ref[2:3, :h_p], 0.0)
    h = jnp.dot(h, w4_ref[...], preferred_element_type=jnp.float32)
    out_ref[...] = (h + b_ref[3:4, :y_p]).astype(out_ref.dtype)


@functools.partial(jax.jit, static_argnames=("tm",))
def _decoder_mlp(inp_pad, w1, w2, w3, w4, b_stack, *, tm):
    """inp_pad: (n_pad, in_p) -> (n_pad, y_p), fused MLP via one pallas_call."""
    n_pad, in_p = inp_pad.shape
    h_p = w1.shape[1]
    y_p = w4.shape[1]
    grid = (n_pad // tm,)
    full = lambda i: (0, 0)  # weights/biases: same full block every step

    kernel = functools.partial(_decoder_mlp_kernel, h_p=h_p, y_p=y_p)

    return pl.pallas_call(
        kernel,
        out_shape=jax.ShapeDtypeStruct((n_pad, y_p), inp_pad.dtype),
        grid_spec=pltpu.PrefetchScalarGridSpec(
            num_scalar_prefetch=0,
            grid=grid,
            in_specs=[
                pl.BlockSpec((tm, in_p), lambda i: (i, 0)),   # row stream
                pl.BlockSpec((in_p, h_p), full),              # W1 (resident)
                pl.BlockSpec((h_p, h_p), full),               # W2
                pl.BlockSpec((h_p, h_p), full),               # W3
                pl.BlockSpec((h_p, y_p), full),               # W4
                pl.BlockSpec(b_stack.shape, full),            # stacked biases
            ],
            out_specs=pl.BlockSpec((tm, y_p), lambda i: (i, 0)),
        ),
        compiler_params=pltpu.CompilerParams(
            dimension_semantics=("parallel",)),
    )(inp_pad, w1, w2, w3, w4, b_stack)


class DecoderSegmentationPallas:
    """JAX/Pallas equivalent of the PyTorch Decoder_segmentation module."""

    def __init__(self, x_dim, z_dim, h_dim, y_dim, key):
        self.x_dim, self.z_dim, self.h_dim, self.y_dim = x_dim, z_dim, h_dim, y_dim
        in_dim = x_dim + z_dim
        k = jax.random.split(key, 8)

        def init_linear(kw, kb, fan_in, fan_out):
            # PyTorch-style uniform init: U(-1/sqrt(fan_in), +1/sqrt(fan_in)).
            # Stored as (in, out) so the kernel computes x @ W + b
            # (== PyTorch's x @ W.T + b with W:(out, in)).
            bound = 1.0 / float(fan_in) ** 0.5
            w = jax.random.uniform(kw, (fan_in, fan_out), jnp.float32, -bound, bound)
            b = jax.random.uniform(kb, (fan_out,), jnp.float32, -bound, bound)
            return w, b

        self.w1, self.b1 = init_linear(k[0], k[1], in_dim, h_dim)
        self.w2, self.b2 = init_linear(k[2], k[3], h_dim, h_dim)
        self.w3, self.b3 = init_linear(k[4], k[5], h_dim, h_dim)
        self.w4, self.b4 = init_linear(k[6], k[7], h_dim, y_dim)

        # --- padded, lane-dense parameter copies used by the kernel ---
        self.in_p = _round_up(in_dim, _LANE)
        self.h_p = _round_up(h_dim, _LANE)
        self.y_p = _round_up(y_dim, _LANE)
        bp = max(self.h_p, self.y_p)

        def pad2(w, r, c):
            return jnp.pad(w, ((0, r - w.shape[0]), (0, c - w.shape[1])))

        def pad1(b, c):
            return jnp.pad(b, (0, c - b.shape[0]))

        self._w1p = pad2(self.w1, self.in_p, self.h_p)
        self._w2p = pad2(self.w2, self.h_p, self.h_p)
        self._w3p = pad2(self.w3, self.h_p, self.h_p)
        self._w4p = pad2(self.w4, self.h_p, self.y_p)

        b_stack = jnp.zeros((8, bp), jnp.float32)       # one resident bias block
        b_stack = b_stack.at[0, :].set(pad1(self.b1, bp))
        b_stack = b_stack.at[1, :].set(pad1(self.b2, bp))
        b_stack = b_stack.at[2, :].set(pad1(self.b3, bp))
        b_stack = b_stack.at[3, :].set(pad1(self.b4, bp))
        self._b_stack = b_stack

    def __call__(self, x, z, *, tm=1024):
        """x: (bs', num_points, x_dim), z: (bs, 1, z_dim) with bs' % bs == 0."""
        batch_size, num_points, _ = x.shape
        # z.repeat(1, num_points, 1) then torch.tile(z, (bs'//bs, 1, 1))
        z = jnp.tile(z, (1, num_points, 1))
        z = jnp.tile(z, (batch_size // z.shape[0], 1, 1))
        inp = jnp.concatenate((x, z), axis=2).astype(jnp.float32)

        n = batch_size * num_points
        inp2d = inp.reshape(n, inp.shape[-1])

        # Large row tile to amortize per-step overhead; cap so small inputs
        # still form a valid grid. Zero-pad rows to a tile multiple (padded
        # rows only see bias terms and are sliced off below).
        tm_eff = min(tm, _round_up(n, 8))
        n_pad = _round_up(n, tm_eff)
        inp_pad = jnp.pad(
            inp2d, ((0, n_pad - n), (0, self.in_p - inp2d.shape[1])))

        out_pad = _decoder_mlp(inp_pad, self._w1p, self._w2p, self._w3p,
                               self._w4p, self._b_stack, tm=tm_eff)
        out = out_pad[:n, :self.y_dim]
        return out.reshape(batch_size, num_points, self.y_dim)


def _reference(dec, x, z):
    """Pure-JAX reference of the same forward pass for a correctness check."""
    batch_size, num_points, _ = x.shape
    zr = jnp.tile(z, (1, num_points, 1))
    zr = jnp.tile(zr, (batch_size // zr.shape[0], 1, 1))
    inp = jnp.concatenate((x, zr), axis=2)
    h = jnp.maximum(inp @ dec.w1 + dec.b1, 0.0)
    h = jnp.maximum(h @ dec.w2 + dec.b2, 0.0)
    h = jnp.maximum(h @ dec.w3 + dec.b3, 0.0)
    return h @ dec.w4 + dec.b4


if __name__ == "__main__":
    key = jax.random.PRNGKey(0)
    k_param, kx, kz = jax.random.split(key, 3)

    # Small shapes consistent with the module:
    #   x: (bs', num_points, x_dim), z: (bs, 1, z_dim), bs' % bs == 0.
    bs_prime, bs, num_points = 2, 1, 8
    x_dim, z_dim, h_dim, y_dim = 4, 3, 32, 2

    dec = DecoderSegmentationPallas(x_dim, z_dim, h_dim, y_dim, k_param)

    x = jax.random.normal(kx, (bs_prime, num_points, x_dim), jnp.float32)
    z = jax.random.normal(kz, (bs, 1, z_dim), jnp.float32)

    out = dec(x, z)
    out = jax.block_until_ready(out)

    assert out.shape == (bs_prime, num_points, y_dim), out.shape
    ref = _reference(dec, x, z)
    assert jnp.allclose(out, ref, atol=1e-4, rtol=1e-4), "mismatch vs reference"

    print("KERNEL_OK")
</pallas_src>

<mosaic_0001>
module attributes {stable_mosaic.version = 11 : i64} {
  func.func @_decoder_mlp_kernel(%arg0: i32, %arg1: memref<16x128xf32, #tpu.memory_space<vmem>>, %arg2: memref<128x128xf32, #tpu.memory_space<vmem>>, %arg3: memref<128x128xf32, #tpu.memory_space<vmem>>, %arg4: memref<128x128xf32, #tpu.memory_space<vmem>>, %arg5: memref<128x128xf32, #tpu.memory_space<vmem>>, %arg6: memref<8x128xf32, #tpu.memory_space<vmem>>, %arg7: memref<16x128xf32, #tpu.memory_space<vmem>>) attributes {dimension_semantics = [#tpu.dimension_semantics<parallel>], iteration_bounds = array<i64: 1>, scalar_prefetch = 0 : i64, scratch_operands = 0 : i64, tpu.core_type = #tpu.core_type<tc>, window_params = [{transform_indices = @transform_0, window_bounds = array<i64: 16, 128>}, {pipeline_mode = #tpu.pipeline_mode<synchronous>, transform_indices = @transform_1, window_bounds = array<i64: 128, 128>}, {pipeline_mode = #tpu.pipeline_mode<synchronous>, transform_indices = @transform_2, window_bounds = array<i64: 128, 128>}, {pipeline_mode = #tpu.pipeline_mode<synchronous>, transform_indices = @transform_3, window_bounds = array<i64: 128, 128>}, {pipeline_mode = #tpu.pipeline_mode<synchronous>, transform_indices = @transform_4, window_bounds = array<i64: 128, 128>}, {pipeline_mode = #tpu.pipeline_mode<synchronous>, transform_indices = @transform_5, window_bounds = array<i64: 8, 128>}, {transform_indices = @transform_6, window_bounds = array<i64: 16, 128>}]} {
    %c0 = arith.constant 0 : index
    %c0_0 = arith.constant 0 : index
    %0 = vector.load %arg1[%c0, %c0_0] : memref<16x128xf32, #tpu.memory_space<vmem>>, vector<16x128xf32>
    %c0_1 = arith.constant 0 : index
    %c0_2 = arith.constant 0 : index
    %1 = vector.load %arg2[%c0_1, %c0_2] : memref<128x128xf32, #tpu.memory_space<vmem>>, vector<128x128xf32>
    %cst = arith.constant dense<0.000000e+00> : vector<16x128xf32>
    %2 = tpu.matmul %0, %1, %cst {dimension_numbers = #tpu.dot_dimension_numbers<[1], [0], [0], [1], [0, 0, 1, 1], [], []>} : vector<16x128xf32>, vector<128x128xf32>, vector<16x128xf32> -> vector<16x128xf32>
    %c0_3 = arith.constant 0 : index
    %c0_4 = arith.constant 0 : index
    %3 = vector.load %arg6[%c0_3, %c0_4] : memref<8x128xf32, #tpu.memory_space<vmem>>, vector<1x128xf32>
    %4 = vector.broadcast %3 : vector<1x128xf32> to vector<16x128xf32>
    %5 = arith.addf %2, %4 : vector<16x128xf32>
    %cst_5 = arith.constant 0.000000e+00 : f32
    %6 = vector.broadcast %cst_5 : f32 to vector<16x128xf32>
    %7 = arith.maximumf %5, %6 : vector<16x128xf32>
    %c0_6 = arith.constant 0 : index
    %c0_7 = arith.constant 0 : index
    %8 = vector.load %arg3[%c0_6, %c0_7] : memref<128x128xf32, #tpu.memory_space<vmem>>, vector<128x128xf32>
    %cst_8 = arith.constant dense<0.000000e+00> : vector<16x128xf32>
    %9 = tpu.matmul %7, %8, %cst_8 {dimension_numbers = #tpu.dot_dimension_numbers<[1], [0], [0], [1], [0, 0, 1, 1], [], []>} : vector<16x128xf32>, vector<128x128xf32>, vector<16x128xf32> -> vector<16x128xf32>
    %c1 = arith.constant 1 : index
    %c0_9 = arith.constant 0 : index
    %10 = vector.load %arg6[%c1, %c0_9] : memref<8x128xf32, #tpu.memory_space<vmem>>, vector<1x128xf32>
    %11 = vector.broadcast %10 : vector<1x128xf32> to vector<16x128xf32>
    %12 = arith.addf %9, %11 : vector<16x128xf32>
    %cst_10 = arith.constant 0.000000e+00 : f32
    %13 = vector.broadcast %cst_10 : f32 to vector<16x128xf32>
    %14 = arith.maximumf %12, %13 : vector<16x128xf32>
    %c0_11 = arith.constant 0 : index
    %c0_12 = arith.constant 0 : index
    %15 = vector.load %arg4[%c0_11, %c0_12] : memref<128x128xf32, #tpu.memory_space<vmem>>, vector<128x128xf32>
    %cst_13 = arith.constant dense<0.000000e+00> : vector<16x128xf32>
    %16 = tpu.matmul %14, %15, %cst_13 {dimension_numbers = #tpu.dot_dimension_numbers<[1], [0], [0], [1], [0, 0, 1, 1], [], []>} : vector<16x128xf32>, vector<128x128xf32>, vector<16x128xf32> -> vector<16x128xf32>
    %c2 = arith.constant 2 : index
    %c0_14 = arith.constant 0 : index
    %17 = vector.load %arg6[%c2, %c0_14] : memref<8x128xf32, #tpu.memory_space<vmem>>, vector<1x128xf32>
    %18 = vector.broadcast %17 : vector<1x128xf32> to vector<16x128xf32>
    %19 = arith.addf %16, %18 : vector<16x128xf32>
    %cst_15 = arith.constant 0.000000e+00 : f32
    %20 = vector.broadcast %cst_15 : f32 to vector<16x128xf32>
    %21 = arith.maximumf %19, %20 : vector<16x128xf32>
    %c0_16 = arith.constant 0 : index
    %c0_17 = arith.constant 0 : index
    %22 = vector.load %arg5[%c0_16, %c0_17] : memref<128x128xf32, #tpu.memory_space<vmem>>, vector<128x128xf32>
    %cst_18 = arith.constant dense<0.000000e+00> : vector<16x128xf32>
    %23 = tpu.matmul %21, %22, %cst_18 {dimension_numbers = #tpu.dot_dimension_numbers<[1], [0], [0], [1], [0, 0, 1, 1], [], []>} : vector<16x128xf32>, vector<128x128xf32>, vector<16x128xf32> -> vector<16x128xf32>
    %c3 = arith.constant 3 : index
    %c0_19 = arith.constant 0 : index
    %24 = vector.load %arg6[%c3, %c0_19] : memref<8x128xf32, #tpu.memory_space<vmem>>, vector<1x128xf32>
    %25 = vector.broadcast %24 : vector<1x128xf32> to vector<16x128xf32>
    %26 = arith.addf %23, %25 : vector<16x128xf32>
    %c0_20 = arith.constant 0 : index
    %c0_21 = arith.constant 0 : index
    %27 = vector.load %arg7[%c0_20, %c0_21] : memref<16x128xf32, #tpu.memory_space<vmem>>, vector<16x128xf32>
    tpu.vector_store %arg7[%c0_20, %c0_21], %26 {strides = array<i32>} : memref<16x128xf32, #tpu.memory_space<vmem>>, vector<16x128xf32>,
    return
  }
  func.func @transform_0(%arg0: i32) -> (i32, i32) {
    %c0_i32 = arith.constant 0 : i32
    %c0_i32_0 = arith.constant 0 : i32
    return %arg0, %c0_i32 : i32, i32
  }
  func.func @transform_1(%arg0: i32) -> (i32, i32) {
    %c0_i32 = arith.constant 0 : i32
    %c0_i32_0 = arith.constant 0 : i32
    %c0_i32_1 = arith.constant 0 : i32
    return %c0_i32, %c0_i32_0 : i32, i32
  }
  func.func @transform_2(%arg0: i32) -> (i32, i32) {
    %c0_i32 = arith.constant 0 : i32
    %c0_i32_0 = arith.constant 0 : i32
    %c0_i32_1 = arith.constant 0 : i32
    return %c0_i32, %c0_i32_0 : i32, i32
  }
  func.func @transform_3(%arg0: i32) -> (i32, i32) {
    %c0_i32 = arith.constant 0 : i32
    %c0_i32_0 = arith.constant 0 : i32
    %c0_i32_1 = arith.constant 0 : i32
    return %c0_i32, %c0_i32_0 : i32, i32
  }
  func.func @transform_4(%arg0: i32) -> (i32, i32) {
    %c0_i32 = arith.constant 0 : i32
    %c0_i32_0 = arith.constant 0 : i32
    %c0_i32_1 = arith.constant 0 : i32
    return %c0_i32, %c0_i32_0 : i32, i32
  }
  func.func @transform_5(%arg0: i32) -> (i32, i32) {
    %c0_i32 = arith.constant 0 : i32
    %c0_i32_0 = arith.constant 0 : i32
    %c0_i32_1 = arith.constant 0 : i32
    return %c0_i32, %c0_i32_0 : i32, i32
  }
  func.func @transform_6(%arg0: i32) -> (i32, i32) {
    %c0_i32 = arith.constant 0 : i32
    %c0_i32_0 = arith.constant 0 : i32
    return %arg0, %c0_i32 : i32, i32
  }
}

</mosaic_0001>

<llo_original>
// kernel: _decoder_mlp.1
$region0: #{_decoder_mlp.1}
  #allocation0 [shape = 'u32[]', space=smem, size = 0x4, offset = 0x4, fixed_abs, tag = 'smem constant byte address 0x4 - core index']
  #allocation1 [shape = 'u32[144,128]{1,0:T(1,128)}', space=vmem, size = 0x12000, scoped, tag = 'internal scratch']
  %s0 = inlined_call_operand.hbm [shape: f32[16,128], index: 0, kind: input, shape index: {}]
  %s1 = inlined_call_operand.hbm [shape: f32[128,128], index: 1, kind: input, shape index: {}]
  %s2 = inlined_call_operand.hbm [shape: f32[128,128], index: 2, kind: input, shape index: {}]
  %s3 = inlined_call_operand.hbm [shape: f32[128,128], index: 3, kind: input, shape index: {}]
  %s4 = inlined_call_operand.hbm [shape: f32[128,128], index: 4, kind: input, shape index: {}]
  %s5 = inlined_call_operand.vmem [shape: f32[8,128], index: 5, kind: input, shape index: {}]
  %s6 = inlined_call_operand.hbm [shape: f32[16,128], index: 6, kind: output, shape index: {}]
  %s7 = sld [smem:[#allocation0]]
  $region54: #{_decoder_mlp.1} parent=0
    _
  %s9 = ssub.s32 1, %s7
  %s10 = scalar_select 0, %s9, %s7
  $region1: #{_decoder_mlp.1} parent=0
    #allocation2 [shape = 'u8[8192]{0}', space=vmem, size = 0x2000, scoped, tag = 'input window, operand 0, single buffered']
    #allocation3 [shape = 's32[1]{0}', space=sflag, size = 0x4, scoped, tag = 'scoped memory for _decoder_mlp.1']
    #allocation4 [shape = 's32[1]{0}', space=sflag, size = 0x4, scoped, tag = 'scoped memory for _decoder_mlp.1']
    #allocation5 [shape = 'u8[65536]{0}', space=vmem, size = 0x10000, scoped, tag = 'input window, operand 1, single buffered']
    #allocation6 [shape = 's32[1]{0}', space=sflag, size = 0x4, scoped, tag = 'scoped memory for _decoder_mlp.1']
    #allocation7 [shape = 'u8[65536]{0}', space=vmem, size = 0x10000, scoped, tag = 'input window, operand 2, single buffered']
    #allocation8 [shape = 'u8[65536]{0}', space=vmem, size = 0x10000, scoped, tag = 'input window, operand 3, single buffered']
    #allocation9 [shape = 's32[1]{0}', space=sflag, size = 0x4, scoped, tag = 'scoped memory for _decoder_mlp.1']
    #allocation10 [shape = 'u8[65536]{0}', space=vmem, size = 0x10000, scoped, tag = 'input window, operand 4, single buffered']
    #allocation11 [shape = 'u8[8192]{0}', space=vmem, size = 0x2000, scoped, tag = 'output window, operand 0, single buffered']
    %11 = vsyncpa [#allocation3], 0
    %12 = vsyncpa [#allocation6], 0
    %13 = vsyncpa [#allocation9], 0
    %14 = vsyncpa [#allocation4], 0
    // Predicated region
    $region2: #{_decoder_mlp.1} parent=1 // pred_check
      _
    $region3: #{_decoder_mlp.1} parent=1 // pred_check_branch
      %16 = sbr.rel (0) target = $region5
    $region4: #{_decoder_mlp.1} parent=1 // pred_region
      %s18 = ssub.s32 256, 256
      %19 = vsyncadd [#allocation3], %s18
      %s20 = sshll.u32 [#allocation2], 4
      %s21 = int_to_ptr.vmem [resolvable:$true] %s20
      %26 = dma.hbm_to_vmem [thread:$0]  %s0, 256, %s21, [#allocation3], 128, 128, 8
    $region5: #{_decoder_mlp.1} parent=1 // pred_fallthru
      _
    // Predicated region
    $region6: #{_decoder_mlp.1} parent=1 // pred_check
      _
    $region7: #{_decoder_mlp.1} parent=1 // pred_check_branch
      %28 = sbr.rel (0) target = $region9
    $region8: #{_decoder_mlp.1} parent=1 // pred_region
      %s30 = ssub.s32 2048, 2048
      %31 = vsyncadd [#allocation6], %s30
      %s32 = sshll.u32 [#allocation5], 4
      %s33 = int_to_ptr.vmem [resolvable:$true] %s32
      %38 = dma.hbm_to_vmem [thread:$0]  %s1, 2048, %s33, [#allocation6], 128, 128, 8
    $region9: #{_decoder_mlp.1} parent=1 // pred_fallthru
      _
    // Predicated region
    $region10: #{_decoder_mlp.1} parent=1 // pred_check
      _
    $region11: #{_decoder_mlp.1} parent=1 // pred_check_branch
      %40 = sbr.rel (0) target = $region13
    $region12: #{_decoder_mlp.1} parent=1 // pred_region
      %s42 = ssub.s32 2048, 2048
      %43 = vsyncadd [#allocation6], %s42
      %s44 = sshll.u32 [#allocation7], 4
      %s45 = int_to_ptr.vmem [resolvable:$true] %s44
      %50 = dma.hbm_to_vmem [thread:$0]  %s2, 2048, %s45, [#allocation6], 128, 128, 8
    $region13: #{_decoder_mlp.1} parent=1 // pred_fallthru
      _
    // Predicated region
    $region14: #{_decoder_mlp.1} parent=1 // pred_check
      _
    $region15: #{_decoder_mlp.1} parent=1 // pred_check_branch
      %52 = sbr.rel (0) target = $region17
    $region16: #{_decoder_mlp.1} parent=1 // pred_region
      %s54 = ssub.s32 2048, 2048
      %55 = vsyncadd [#allocation9], %s54
      %s56 = sshll.u32 [#allocation8], 4
      %s57 = int_to_ptr.vmem [resolvable:$true] %s56
      %62 = dma.hbm_to_vmem [thread:$0]  %s3, 2048, %s57, [#allocation9], 128, 128, 8
    $region17: #{_decoder_mlp.1} parent=1 // pred_fallthru
      _
    // Predicated region
    $region18: #{_decoder_mlp.1} parent=1 // pred_check
      _
    $region19: #{_decoder_mlp.1} parent=1 // pred_check_branch
      %64 = sbr.rel (0) target = $region21
    $region20: #{_decoder_mlp.1} parent=1 // pred_region
      %s66 = ssub.s32 2048, 2048
      %67 = vsyncadd [#allocation9], %s66
      %s68 = sshll.u32 [#allocation10], 4
      %s69 = int_to_ptr.vmem [resolvable:$true] %s68
      %74 = dma.hbm_to_vmem [thread:$0]  %s4, 2048, %s69, [#allocation9], 128, 128, 8
    $region21: #{_decoder_mlp.1} parent=1 // pred_fallthru
      _
    // Predicated region
    $region22: #{_decoder_mlp.1} parent=1 // pred_check
      _
    $region23: #{_decoder_mlp.1} parent=1 // pred_check_branch
      %76 = sbr.rel (0) target = $region25
    $region24: #{_decoder_mlp.1} parent=1 // pred_region
      _
    $region25: #{_decoder_mlp.1} parent=1 // pred_fallthru
      _
    // Predicated region
    $region26: #{_decoder_mlp.1} parent=1 // pred_check
      _
    $region27: #{_decoder_mlp.1} parent=1 // pred_check_branch
      %78 = sbr.rel (0) target = $region29
    $region28: #{_decoder_mlp.1} parent=1 // pred_region
      %79 = dma.done [#allocation3], 256
    $region29: #{_decoder_mlp.1} parent=1 // pred_fallthru
      _
    // Predicated region
    $region30: #{_decoder_mlp.1} parent=1 // pred_check
      _
    $region31: #{_decoder_mlp.1} parent=1 // pred_check_branch
      %81 = sbr.rel (0) target = $region33
    $region32: #{_decoder_mlp.1} parent=1 // pred_region
      %82 = dma.done [#allocation6], 2048
    $region33: #{_decoder_mlp.1} parent=1 // pred_fallthru
      _
    // Predicated region
    $region34: #{_decoder_mlp.1} parent=1 // pred_check
      _
    $region35: #{_decoder_mlp.1} parent=1 // pred_check_branch
      %84 = sbr.rel (0) target = $region37
    $region36: #{_decoder_mlp.1} parent=1 // pred_region
      %85 = dma.done [#allocation6], 2048
    $region37: #{_decoder_mlp.1} parent=1 // pred_fallthru
      _
    // Predicated region
    $region38: #{_decoder_mlp.1} parent=1 // pred_check
      _
    $region39: #{_decoder_mlp.1} parent=1 // pred_check_branch
      %87 = sbr.rel (0) target = $region41
    $region40: #{_decoder_mlp.1} parent=1 // pred_region
      %88 = dma.done [#allocation9], 2048
    $region41: #{_decoder_mlp.1} parent=1 // pred_fallthru
      _
    // Predicated region
    $region42: #{_decoder_mlp.1} parent=1 // pred_check
      _
    $region43: #{_decoder_mlp.1} parent=1 // pred_check_branch
      %90 = sbr.rel (0) target = $region45
    $region44: #{_decoder_mlp.1} parent=1 // pred_region
      %91 = dma.done [#allocation9], 2048
    $region45: #{_decoder_mlp.1} parent=1 // pred_fallthru
      _
    %v92 = vld [vmem:[#allocation2] sm:$0xff]
    %v93 = vld [vmem:[#allocation2 + $0x8] sm:$0xff]
    %v94 = vld [vmem:[#allocation5] sm:$0xff]
    %v95 = vld [vmem:[#allocation5 + $0x8] sm:$0xff]
    %v96 = vld [vmem:[#allocation5 + $0x10] sm:$0xff]
    %v97 = vld [vmem:[#allocation5 + $0x18] sm:$0xff]
    %v98 = vld [vmem:[#allocation5 + $0x20] sm:$0xff]
    %v99 = vld [vmem:[#allocation5 + $0x28] sm:$0xff]
    %v100 = vld [vmem:[#allocation5 + $0x30] sm:$0xff]
    %v101 = vld [vmem:[#allocation5 + $0x38] sm:$0xff]
    %v102 = vld [vmem:[#allocation5 + $0x40] sm:$0xff]
    %v103 = vld [vmem:[#allocation5 + $0x48] sm:$0xff]
    %v104 = vld [vmem:[#allocation5 + $0x50] sm:$0xff]
    %v105 = vld [vmem:[#allocation5 + $0x58] sm:$0xff]
    %v106 = vld [vmem:[#allocation5 + $0x60] sm:$0xff]
    %v107 = vld [vmem:[#allocation5 + $0x68] sm:$0xff]
    %v108 = vld [vmem:[#allocation5 + $0x70] sm:$0xff]
    %v109 = vld [vmem:[#allocation5 + $0x78] sm:$0xff]
    %v110 = vld [vmem:[%s5] sm:$0x1]
    %v111 = vlaneseq
    %v112 = vshrl.u32 %v111, 7
    %v113 = vsub.s32 0, %v112
    %v114 = vrot.slane %v110, %v113
    %115 = vmatprep.subr.mxu0 0.0
    %116 = vmatpush1.msra.mxu0 %v94
    %117 = vmatprep.subr.mxu0 0.0
    %118 = vmatpush1.msra.mxu0 %v95
    %119 = vmatprep.subr.mxu0 0.0
    %120 = vmatpush1.msra.mxu0 %v96
    %121 = vmatprep.subr.mxu0 0.0
    %122 = vmatpush1.msra.mxu0 %v97
    %123 = vmatprep.subr.mxu0 0.0
    %124 = vmatpush1.msra.mxu0 %v98
    %125 = vmatprep.subr.mxu0 0.0
    %126 = vmatpush1.msra.mxu0 %v99
    %127 = vmatprep.subr.mxu0 0.0
    %128 = vmatpush1.msra.mxu0 %v100
    %129 = vmatprep.subr.mxu0 0.0
    %130 = vmatpush1.msra.mxu0 %v101
    %131 = vmatprep.subr.mxu0 0.0
    %132 = vmatpush1.msra.mxu0 %v102
    %133 = vmatprep.subr.mxu0 0.0
    %134 = vmatpush1.msra.mxu0 %v103
    %135 = vmatprep.subr.mxu0 0.0
    %136 = vmatpush1.msra.mxu0 %v104
    %137 = vmatprep.subr.mxu0 0.0
    %138 = vmatpush1.msra.mxu0 %v105
    %139 = vmatprep.subr.mxu0 0.0
    %140 = vmatpush1.msra.mxu0 %v106
    %141 = vmatprep.subr.mxu0 0.0
    %142 = vmatpush1.msra.mxu0 %v107
    %143 = vmatprep.subr.mxu0 0.0
    %144 = vmatpush1.msra.mxu0 %v108
    %145 = vmatprep.subr.mxu0 0.0
    %146 = vmatpush1.msra.mxu0 %v109
    %147 = vmatprep.subr.mxu0 0.0
    %148 = vmatpush1.msra.mxu0 0.0
    %149 = vmatprep.subr.mxu0 0.0
    %150 = vmatpush1.msra.mxu0 0.0
    %151 = vmatprep.subr.mxu0 0.0
    %152 = vmatpush1.msra.mxu0 0.0
    %153 = vmatprep.subr.mxu0 0.0
    %154 = vmatpush1.msra.mxu0 0.0
    %155 = vmatprep.subr.mxu0 0.0
    %156 = vmatpush1.msra.mxu0 0.0
    %157 = vmatprep.subr.mxu0 0.0
    %158 = vmatpush1.msra.mxu0 0.0
    %159 = vmatprep.subr.mxu0 0.0
    %160 = vmatpush1.msra.mxu0 0.0
    %161 = vmatprep.subr.mxu0 0.0
    %162 = vmatpush1.msra.mxu0 0.0
    %163 = vmatprep.subr.mxu0 0.0
    %164 = vmatpush1.msra.mxu0 0.0
    %165 = vmatprep.subr.mxu0 0.0
    %166 = vmatpush1.msra.mxu0 0.0
    %167 = vmatprep.subr.mxu0 0.0
    %168 = vmatpush1.msra.mxu0 0.0
    %169 = vmatprep.subr.mxu0 0.0
    %170 = vmatpush1.msra.mxu0 0.0
    %171 = vmatprep.subr.mxu0 0.0
    %172 = vmatpush1.msra.mxu0 0.0
    %173 = vmatprep.subr.mxu0 0.0
    %174 = vmatpush1.msra.mxu0 0.0
    %175 = vmatprep.subr.mxu0 0.0
    %176 = vmatpush1.msra.mxu0 0.0
    %177 = vmatprep.subr.mxu0 0.0
    %178 = vmatpush1.msra.mxu0 0.0
    %179 = vmatprep.mubr.f32.mxu0 0.0
    %180 = vmatmul.mubr.f32.gmra.mrb[0].mxu0 %v92
    %v181 = vpop.f32.mrb[0].mxu0
    %v182 = vadd.f32 %v114, %v181
    %v183 = vpop.f32.mrb[0].mxu0
    %184 = vmatprep.mubr.f32.mxu0 0.0
    %185 = vmatmul.mubr.f32.gmra.mrb[0].mxu0 %v93
    %v186 = vpop.f32.mrb[0].mxu0
    %v187 = vadd.f32 %v114, %v186
    %v188 = vpop.f32.mrb[0].mxu0
    %189 = vdwg.mxu0
    %v190 = vmax.f32 %v182, 0.0
    %v191 = vmax.f32 %v187, 0.0
    %v192 = vld [vmem:[#allocation7] sm:$0xff]
    %v193 = vld [vmem:[#allocation7 + $0x8] sm:$0xff]
    %v194 = vld [vmem:[#allocation7 + $0x10] sm:$0xff]
    %v195 = vld [vmem:[#allocation7 + $0x18] sm:$0xff]
    %v196 = vld [vmem:[#allocation7 + $0x20] sm:$0xff]
    %v197 = vld [vmem:[#allocation7 + $0x28] sm:$0xff]
    %v198 = vld [vmem:[#allocation7 + $0x30] sm:$0xff]
    %v199 = vld [vmem:[#allocation7 + $0x38] sm:$0xff]
    %v200 = vld [vmem:[#allocation7 + $0x40] sm:$0xff]
    %v201 = vld [vmem:[#allocation7 + $0x48] sm:$0xff]
    %v202 = vld [vmem:[#allocation7 + $0x50] sm:$0xff]
    %v203 = vld [vmem:[#allocation7 + $0x58] sm:$0xff]
    %v204 = vld [vmem:[#allocation7 + $0x60] sm:$0xff]
    %v205 = vld [vmem:[#allocation7 + $0x68] sm:$0xff]
    %v206 = vld [vmem:[#allocation7 + $0x70] sm:$0xff]
    %v207 = vld [vmem:[#allocation7 + $0x78] sm:$0xff]
    %v208 = vld [vmem:[%s5 + $0x1] sm:$0x1]
    %v209 = vlaneseq
    %v210 = vshrl.u32 %v209, 7
    %v211 = vsub.s32 0, %v210
    %v212 = vrot.slane %v208, %v211
    %213 = vmatprep.subr.mxu0 0.0
    %214 = vmatpush1.msra.mxu0 %v192
    %215 = vmatprep.subr.mxu0 0.0
    %216 = vmatpush1.msra.mxu0 %v193
    %217 = vmatprep.subr.mxu0 0.0
    %218 = vmatpush1.msra.mxu0 %v194
    %219 = vmatprep.subr.mxu0 0.0
    %220 = vmatpush1.msra.mxu0 %v195
    %221 = vmatprep.subr.mxu0 0.0
    %222 = vmatpush1.msra.mxu0 %v196
    %223 = vmatprep.subr.mxu0 0.0
    %224 = vmatpush1.msra.mxu0 %v197
    %225 = vmatprep.subr.mxu0 0.0
    %226 = vmatpush1.msra.mxu0 %v198
    %227 = vmatprep.subr.mxu0 0.0
    %228 = vmatpush1.msra.mxu0 %v199
    %229 = vmatprep.subr.mxu0 0.0
    %230 = vmatpush1.msra.mxu0 %v200
    %231 = vmatprep.subr.mxu0 0.0
    %232 = vmatpush1.msra.mxu0 %v201
    %233 = vmatprep.subr.mxu0 0.0
    %234 = vmatpush1.msra.mxu0 %v202
    %235 = vmatprep.subr.mxu0 0.0
    %236 = vmatpush1.msra.mxu0 %v203
    %237 = vmatprep.subr.mxu0 0.0
    %238 = vmatpush1.msra.mxu0 %v204
    %239 = vmatprep.subr.mxu0 0.0
    %240 = vmatpush1.msra.mxu0 %v205
    %241 = vmatprep.subr.mxu0 0.0
    %242 = vmatpush1.msra.mxu0 %v206
    %243 = vmatprep.subr.mxu0 0.0
    %244 = vmatpush1.msra.mxu0 %v207
    %245 = vmatprep.subr.mxu0 0.0
    %246 = vmatpush1.msra.mxu0 0.0
    %247 = vmatprep.subr.mxu0 0.0
    %248 = vmatpush1.msra.mxu0 0.0
    %249 = vmatprep.subr.mxu0 0.0
    %250 = vmatpush1.msra.mxu0 0.0
    %251 = vmatprep.subr.mxu0 0.0
    %252 = vmatpush1.msra.mxu0 0.0
    %253 = vmatprep.subr.mxu0 0.0
    %254 = vmatpush1.msra.mxu0 0.0
    %255 = vmatprep.subr.mxu0 0.0
    %256 = vmatpush1.msra.mxu0 0.0
    %257 = vmatprep.subr.mxu0 0.0
    %258 = vmatpush1.msra.mxu0 0.0
    %259 = vmatprep.subr.mxu0 0.0
    %260 = vmatpush1.msra.mxu0 0.0
    %261 = vmatprep.subr.mxu0 0.0
    %262 = vmatpush1.msra.mxu0 0.0
    %263 = vmatprep.subr.mxu0 0.0
    %264 = vmatpush1.msra.mxu0 0.0
    %265 = vmatprep.subr.mxu0 0.0
    %266 = vmatpush1.msra.mxu0 0.0
    %267 = vmatprep.subr.mxu0 0.0
    %268 = vmatpush1.msra.mxu0 0.0
    %269 = vmatprep.subr.mxu0 0.0
    %270 = vmatpush1.msra.mxu0 0.0
    %271 = vmatprep.subr.mxu0 0.0
    %272 = vmatpush1.msra.mxu0 0.0
    %273 = vmatprep.subr.mxu0 0.0
    %274 = vmatpush1.msra.mxu0 0.0
    %275 = vmatprep.subr.mxu0 0.0
    %276 = vmatpush1.msra.mxu0 0.0
    %277 = vmatprep.mubr.f32.mxu0 0.0
    %278 = vmatmul.mubr.f32.gmra.mrb[0].mxu0 %v190
    %v279 = vpop.f32.mrb[0].mxu0
    %v280 = vadd.f32 %v212, %v279
    %v281 = vpop.f32.mrb[0].mxu0
    %282 = vmatprep.mubr.f32.mxu0 0.0
    %283 = vmatmul.mubr.f32.gmra.mrb[0].mxu0 %v191
    %v284 = vpop.f32.mrb[0].mxu0
    %v285 = vadd.f32 %v212, %v284
    %v286 = vpop.f32.mrb[0].mxu0
    %287 = vdwg.mxu0
    %v288 = vmax.f32 %v280, 0.0
    %v289 = vmax.f32 %v285, 0.0
    %v290 = vld [vmem:[#allocation8] sm:$0xff]
    %v291 = vld [vmem:[#allocation8 + $0x8] sm:$0xff]
    %v292 = vld [vmem:[#allocation8 + $0x10] sm:$0xff]
    %v293 = vld [vmem:[#allocation8 + $0x18] sm:$0xff]
    %v294 = vld [vmem:[#allocation8 + $0x20] sm:$0xff]
    %v295 = vld [vmem:[#allocation8 + $0x28] sm:$0xff]
    %v296 = vld [vmem:[#allocation8 + $0x30] sm:$0xff]
    %v297 = vld [vmem:[#allocation8 + $0x38] sm:$0xff]
    %v298 = vld [vmem:[#allocation8 + $0x40] sm:$0xff]
    %v299 = vld [vmem:[#allocation8 + $0x48] sm:$0xff]
    %v300 = vld [vmem:[#allocation8 + $0x50] sm:$0xff]
    %v301 = vld [vmem:[#allocation8 + $0x58] sm:$0xff]
    %v302 = vld [vmem:[#allocation8 + $0x60] sm:$0xff]
    %v303 = vld [vmem:[#allocation8 + $0x68] sm:$0xff]
    %v304 = vld [vmem:[#allocation8 + $0x70] sm:$0xff]
    %v305 = vld [vmem:[#allocation8 + $0x78] sm:$0xff]
    %v306 = vld [vmem:[%s5 + $0x2] sm:$0x1]
    %v307 = vlaneseq
    %v308 = vshrl.u32 %v307, 7
    %v309 = vsub.s32 0, %v308
    %v310 = vrot.slane %v306, %v309
    %311 = vmatprep.subr.mxu0 0.0
    %312 = vmatpush1.msra.mxu0 %v290
    %313 = vmatprep.subr.mxu0 0.0
    %314 = vmatpush1.msra.mxu0 %v291
    %315 = vmatprep.subr.mxu0 0.0
    %316 = vmatpush1.msra.mxu0 %v292
    %317 = vmatprep.subr.mxu0 0.0
    %318 = vmatpush1.msra.mxu0 %v293
    %319 = vmatprep.subr.mxu0 0.0
    %320 = vmatpush1.msra.mxu0 %v294
    %321 = vmatprep.subr.mxu0 0.0
    %322 = vmatpush1.msra.mxu0 %v295
    %323 = vmatprep.subr.mxu0 0.0
    %324 = vmatpush1.msra.mxu0 %v296
    %325 = vmatprep.subr.mxu0 0.0
    %326 = vmatpush1.msra.mxu0 %v297
    %327 = vmatprep.subr.mxu0 0.0
    %328 = vmatpush1.msra.mxu0 %v298
    %329 = vmatprep.subr.mxu0 0.0
    %330 = vmatpush1.msra.mxu0 %v299
    %331 = vmatprep.subr.mxu0 0.0
    %332 = vmatpush1.msra.mxu0 %v300
    %333 = vmatprep.subr.mxu0 0.0
    %334 = vmatpush1.msra.mxu0 %v301
    %335 = vmatprep.subr.mxu0 0.0
    %336 = vmatpush1.msra.mxu0 %v302
    %337 = vmatprep.subr.mxu0 0.0
    %338 = vmatpush1.msra.mxu0 %v303
    %339 = vmatprep.subr.mxu0 0.0
    %340 = vmatpush1.msra.mxu0 %v304
    %341 = vmatprep.subr.mxu0 0.0
    %342 = vmatpush1.msra.mxu0 %v305
    %343 = vmatprep.subr.mxu0 0.0
    %344 = vmatpush1.msra.mxu0 0.0
    %345 = vmatprep.subr.mxu0 0.0
    %346 = vmatpush1.msra.mxu0 0.0
    %347 = vmatprep.subr.mxu0 0.0
    %348 = vmatpush1.msra.mxu0 0.0
    %349 = vmatprep.subr.mxu0 0.0
    %350 = vmatpush1.msra.mxu0 0.0
    %351 = vmatprep.subr.mxu0 0.0
    %352 = vmatpush1.msra.mxu0 0.0
    %353 = vmatprep.subr.mxu0 0.0
    %354 = vmatpush1.msra.mxu0 0.0
    %355 = vmatprep.subr.mxu0 0.0
    %356 = vmatpush1.msra.mxu0 0.0
    %357 = vmatprep.subr.mxu0 0.0
    %358 = vmatpush1.msra.mxu0 0.0
    %359 = vmatprep.subr.mxu0 0.0
    %360 = vmatpush1.msra.mxu0 0.0
    %361 = vmatprep.subr.mxu0 0.0
    %362 = vmatpush1.msra.mxu0 0.0
    %363 = vmatprep.subr.mxu0 0.0
    %364 = vmatpush1.msra.mxu0 0.0
    %365 = vmatprep.subr.mxu0 0.0
    %366 = vmatpush1.msra.mxu0 0.0
    %367 = vmatprep.subr.mxu0 0.0
    %368 = vmatpush1.msra.mxu0 0.0
    %369 = vmatprep.subr.mxu0 0.0
    %370 = vmatpush1.msra.mxu0 0.0
    %371 = vmatprep.subr.mxu0 0.0
    %372 = vmatpush1.msra.mxu0 0.0
    %373 = vmatprep.subr.mxu0 0.0
    %374 = vmatpush1.msra.mxu0 0.0
    %375 = vmatprep.mubr.f32.mxu0 0.0
    %376 = vmatmul.mubr.f32.gmra.mrb[0].mxu0 %v288
    %v377 = vpop.f32.mrb[0].mxu0
    %v378 = vadd.f32 %v310, %v377
    %v379 = vpop.f32.mrb[0].mxu0
    %380 = vmatprep.mubr.f32.mxu0 0.0
    %381 = vmatmul.mubr.f32.gmra.mrb[0].mxu0 %v289
    %v382 = vpop.f32.mrb[0].mxu0
    %v383 = vadd.f32 %v310, %v382
    %v384 = vpop.f32.mrb[0].mxu0
    %385 = vdwg.mxu0
    %v386 = vmax.f32 %v378, 0.0
    %v387 = vmax.f32 %v383, 0.0
    %v388 = vld [vmem:[#allocation10] sm:$0xff]
    %v389 = vld [vmem:[#allocation10 + $0x8] sm:$0xff]
    %v390 = vld [vmem:[#allocation10 + $0x10] sm:$0xff]
    %v391 = vld [vmem:[#allocation10 + $0x18] sm:$0xff]
    %v392 = vld [vmem:[#allocation10 + $0x20] sm:$0xff]
    %v393 = vld [vmem:[#allocation10 + $0x28] sm:$0xff]
    %v394 = vld [vmem:[#allocation10 + $0x30] sm:$0xff]
    %v395 = vld [vmem:[#allocation10 + $0x38] sm:$0xff]
    %v396 = vld [vmem:[#allocation10 + $0x40] sm:$0xff]
    %v397 = vld [vmem:[#allocation10 + $0x48] sm:$0xff]
    %v398 = vld [vmem:[#allocation10 + $0x50] sm:$0xff]
    %v399 = vld [vmem:[#allocation10 + $0x58] sm:$0xff]
    %v400 = vld [vmem:[#allocation10 + $0x60] sm:$0xff]
    %v401 = vld [vmem:[#allocation10 + $0x68] sm:$0xff]
    %v402 = vld [vmem:[#allocation10 + $0x70] sm:$0xff]
    %v403 = vld [vmem:[#allocation10 + $0x78] sm:$0xff]
    %v404 = vld [vmem:[%s5 + $0x3] sm:$0x1]
    %v405 = vlaneseq
    %v406 = vshrl.u32 %v405, 7
    %v407 = vsub.s32 0, %v406
    %v408 = vrot.slane %v404, %v407
    %409 = vmatprep.subr.mxu0 0.0
    %410 = vmatpush1.msra.mxu0 %v388
    %411 = vmatprep.subr.mxu0 0.0
    %412 = vmatpush1.msra.mxu0 %v389
    %413 = vmatprep.subr.mxu0 0.0
    %414 = vmatpush1.msra.mxu0 %v390
    %415 = vmatprep.subr.mxu0 0.0
    %416 = vmatpush1.msra.mxu0 %v391
    %417 = vmatprep.subr.mxu0 0.0
    %418 = vmatpush1.msra.mxu0 %v392
    %419 = vmatprep.subr.mxu0 0.0
    %420 = vmatpush1.msra.mxu0 %v393
    %421 = vmatprep.subr.mxu0 0.0
    %422 = vmatpush1.msra.mxu0 %v394
    %423 = vmatprep.subr.mxu0 0.0
    %424 = vmatpush1.msra.mxu0 %v395
    %425 = vmatprep.subr.mxu0 0.0
    %426 = vmatpush1.msra.mxu0 %v396
    %427 = vmatprep.subr.mxu0 0.0
    %428 = vmatpush1.msra.mxu0 %v397
    %429 = vmatprep.subr.mxu0 0.0
    %430 = vmatpush1.msra.mxu0 %v398
    %431 = vmatprep.subr.mxu0 0.0
    %432 = vmatpush1.msra.mxu0 %v399
    %433 = vmatprep.subr.mxu0 0.0
    %434 = vmatpush1.msra.mxu0 %v400
    %435 = vmatprep.subr.mxu0 0.0
    %436 = vmatpush1.msra.mxu0 %v401
    %437 = vmatprep.subr.mxu0 0.0
    %438 = vmatpush1.msra.mxu0 %v402
    %439 = vmatprep.subr.mxu0 0.0
    %440 = vmatpush1.msra.mxu0 %v403
    %441 = vmatprep.subr.mxu0 0.0
    %442 = vmatpush1.msra.mxu0 0.0
    %443 = vmatprep.subr.mxu0 0.0
    %444 = vmatpush1.msra.mxu0 0.0
    %445 = vmatprep.subr.mxu0 0.0
    %446 = vmatpush1.msra.mxu0 0.0
    %447 = vmatprep.subr.mxu0 0.0
    %448 = vmatpush1.msra.mxu0 0.0
    %449 = vmatprep.subr.mxu0 0.0
    %450 = vmatpush1.msra.mxu0 0.0
    %451 = vmatprep.subr.mxu0 0.0
    %452 = vmatpush1.msra.mxu0 0.0
    %453 = vmatprep.subr.mxu0 0.0
    %454 = vmatpush1.msra.mxu0 0.0
    %455 = vmatprep.subr.mxu0 0.0
    %456 = vmatpush1.msra.mxu0 0.0
    %457 = vmatprep.subr.mxu0 0.0
    %458 = vmatpush1.msra.mxu0 0.0
    %459 = vmatprep.subr.mxu0 0.0
    %460 = vmatpush1.msra.mxu0 0.0
    %461 = vmatprep.subr.mxu0 0.0
    %462 = vmatpush1.msra.mxu0 0.0
    %463 = vmatprep.subr.mxu0 0.0
    %464 = vmatpush1.msra.mxu0 0.0
    %465 = vmatprep.subr.mxu0 0.0
    %466 = vmatpush1.msra.mxu0 0.0
    %467 = vmatprep.subr.mxu0 0.0
    %468 = vmatpush1.msra.mxu0 0.0
    %469 = vmatprep.subr.mxu0 0.0
    %470 = vmatpush1.msra.mxu0 0.0
    %471 = vmatprep.subr.mxu0 0.0
    %472 = vmatpush1.msra.mxu0 0.0
    %473 = vmatprep.mubr.f32.mxu0 0.0
    %474 = vmatmul.mubr.f32.gmra.mrb[0].mxu0 %v386
    %v475 = vpop.f32.mrb[0].mxu0
    %v476 = vadd.f32 %v408, %v475
    %v477 = vpop.f32.mrb[0].mxu0
    %478 = vmatprep.mubr.f32.mxu0 0.0
    %479 = vmatmul.mubr.f32.gmra.mrb[0].mxu0 %v387
    %v480 = vpop.f32.mrb[0].mxu0
    %v481 = vadd.f32 %v408, %v480
    %v482 = vpop.f32.mrb[0].mxu0
    %483 = vdwg.mxu0
    %484 = vst [vmem:[#allocation11] sm:$0xff] %v476
    %485 = vst [vmem:[#allocation11 + $0x8] sm:$0xff] %v481
    // Predicated region
    $region46: #{_decoder_mlp.1} parent=1 // pred_check
      _
    $region47: #{_decoder_mlp.1} parent=1 // pred_check_branch
      %487 = sbr.rel (0) target = $region49
    $region48: #{_decoder_mlp.1} parent=1 // pred_region
      %s489 = ssub.s32 256, 256
      %490 = vsyncadd [#allocation4], %s489
      %s491 = sshll.u32 [#allocation11], 4
      %s492 = int_to_ptr.vmem [resolvable:$true] %s491
      %497 = dma.vmem_to_hbm [thread:$0]  %s492, 256, %s6, [#allocation4], 128, 128, 8
    $region49: #{_decoder_mlp.1} parent=1 // pred_fallthru
      _
    // Predicated region
    $region50: #{_decoder_mlp.1} parent=1 // pred_check
      _
    $region51: #{_decoder_mlp.1} parent=1 // pred_check_branch
      %499 = sbr.rel (0) target = $region53
    $region52: #{_decoder_mlp.1} parent=1 // pred_region
      %500 = dma.done [#allocation4], 256
    $region53: #{_decoder_mlp.1} parent=1 // pred_fallthru
      _
    %501 = vsyncpa [#allocation3], 1
    %502 = vsyncpa [#allocation6], 1
    %503 = vsyncpa [#allocation9], 1
    %504 = vsyncpa [#allocation4], 1

</llo_original>
